<compile_context>
chip_gen: v7x
topology: tpu7x:2x2x1
jax: 0.10.0
libtpu: 0.0.40
codegen_flags: <defaults>
</compile_context>

<pallas_src>
import functools

import jax
import jax.numpy as jnp
import numpy as np
from jax.experimental import pallas as pl
from jax.experimental.pallas import tpu as pltpu

# Search-space primitives (the original repo's PRIMITIVES/OPS are not shipped
# with the module; this deterministic 8-op set matches MixedOp/op_str
# semantics: each op is f(x1, x2) with x1 = s0, x2 = s1).
PRIMITIVES = ["add", "mul", "iden1", "one_plus", "one_minus", "neg", "square", "abs"]
NUM_OPS = len(PRIMITIVES)

# Every primitive (times its gumbel scale) is a linear combination of the
# basis [1, s0, s1, s0*s1, s0^2, |s0|]; the coefficients are selected on the
# host side so the kernel is branch-free and vreg-resident.
_BASIS = np.array(
    [
        [0, 1, 1, 0, 0, 0],   # add       : s0 + s1
        [0, 0, 0, 1, 0, 0],   # mul       : s0 * s1
        [0, 1, 0, 0, 0, 0],   # iden1     : s0
        [1, 1, 0, 0, 0, 0],   # one_plus  : 1 + s0
        [1, -1, 0, 0, 0, 0],  # one_minus : 1 - s0
        [0, -1, 0, 0, 0, 0],  # neg       : -s0
        [0, 0, 0, 0, 1, 0],   # square    : s0 * s0
        [0, 0, 0, 0, 0, 1],   # abs       : |s0|
    ],
    dtype=np.float32,
)


def _op_candidates(s0, s1):
    # Order must match PRIMITIVES (used only by the pure-JAX reference).
    return [
        s0 + s1,        # add
        s0 * s1,        # mul
        s0,             # iden1
        1.0 + s0,       # one_plus
        1.0 - s0,       # one_minus
        -s0,            # neg
        s0 * s0,        # square
        jnp.abs(s0),    # abs
    ]


def _loss_kernel(coef_ref, nvalid_ref, logits_ref, target_ref,
                 loss_part_ref, nll_part_ref, *, num_states, noCEFormat):
    # Transposed, lane-dense layout: classes on sublanes, samples on lanes.
    logits = logits_ref[...].astype(jnp.float32)              # (C, T)
    tgt = target_ref[...]                                      # (1, T) int32
    C, T = logits.shape
    neg_big = jnp.float32(-1e30)

    # Fused z-space softmax: only z is materialized as a (C, T) slab.
    m = jnp.max(logits, axis=0, keepdims=True)                 # (1, T)
    z = logits - m                                             # (C, T)
    lse = jnp.log(jnp.sum(jnp.exp(z), axis=0, keepdims=True))  # (1, T)

    # z at the target class via masked sublane max (exact select, no gather).
    cls = jax.lax.broadcasted_iota(jnp.int32, (C, 1), 0)       # (C, 1)
    z_k = jnp.max(jnp.where(cls == tgt, z, neg_big), axis=0, keepdims=True)
    # Top-1 strictly below the target class, in z-space (monotone equivalent
    # of the reference's probability-space comparison; exp(-1e30 - lse) -> 0
    # covers the "nothing below p_k" case).
    z_j = jnp.max(jnp.where(z < z_k, z, neg_big), axis=0, keepdims=True)

    logp_k = z_k - lse                                         # (1, T)
    p_k = jnp.exp(logp_k)
    p_j = jnp.exp(z_j - lse)

    # Chained MixedOp state machine, fully in vregs.  Per-state coefficients
    # (already multiplied by the gumbel scale) are SMEM scalars.
    s0, s1 = p_k, p_j
    for i in range(num_states):
        c0 = coef_ref[6 * i + 0]
        c1 = coef_ref[6 * i + 1]
        c2 = coef_ref[6 * i + 2]
        c3 = coef_ref[6 * i + 3]
        c4 = coef_ref[6 * i + 4]
        c5 = coef_ref[6 * i + 5]
        new = (c0 + c1 * s0 + c2 * s1
               + c3 * (s0 * s1) + c4 * (s0 * s0) + c5 * jnp.abs(s0))
        s0, s1 = s1, new

    nll = -logp_k
    loss = s1 if noCEFormat else s1 * nll

    # Mask padded samples with where (not multiply: avoids Inf*0 -> NaN).
    col = jax.lax.broadcasted_iota(jnp.int32, (1, T), 1)
    valid = (pl.program_id(0) * T + col) < nvalid_ref[0]
    loss_sum = jnp.sum(jnp.where(valid, loss, 0.0))
    nll_sum = jnp.sum(jnp.where(valid, nll, 0.0))

    # Per-tile partial sums (distinct output block per grid step -> the grid
    # axis can be "parallel"; the wrapper does the final tiny reduction).
    loss_part_ref[...] = jnp.full(loss_part_ref.shape, loss_sum, jnp.float32)
    nll_part_ref[...] = jnp.full(nll_part_ref.shape, nll_sum, jnp.float32)


def _vmem_plan(N, C, in_bytes):
    """Generation-aware tile width and scoped-VMEM limit."""
    try:
        cap = pltpu.get_tpu_info().vmem_capacity_bytes
    except Exception:
        cap = 64 * 1024 * 1024  # conservative (v7x-class) fallback
    if cap <= 64 * 1024 * 1024:          # v7x: 64 MiB per TensorCore
        budget, lane_cap, vmem_limit = 16 << 20, 8192, 40 << 20
    else:                                 # v5e / v6e: 128 MiB
        budget, lane_cap, vmem_limit = 48 << 20, 16384, 64 << 20
    # Per sample column: double-buffered native-dtype logits + int32 target
    # + ~4 live f32 (C, T) slabs (z, exp(z), masked-compare temporaries)
    # + small (1, T) temps.
    per_col = C * (2 * in_bytes + 4 * 4) + 2 * 4 + 64
    t = max(budget // max(per_col, 1), 128)
    tile_n = min(lane_cap, (t // 128) * 128)
    tile_n = max(128, min(tile_n, ((N + 127) // 128) * 128))
    return tile_n, vmem_limit


def loss_func_forward(logits, target, alphas_ops, g_ops, *,
                      tau=0.1, noCEFormat=True, gumbel_training=True,
                      tile_n=None):
    """Pallas implementation of LossFunc.forward -> (loss.sum(), nll.sum())."""
    N, C = logits.shape
    num_states = alphas_ops.shape[0]

    # --- glue: architecture weights (tiny, parameter-sized) -----------------
    if gumbel_training:
        ops_weights = jax.nn.softmax((alphas_ops + g_ops) / tau, axis=-1)
    else:
        ops_weights = jax.nn.softmax(alphas_ops, axis=-1)
    op_idx = jnp.argmax(ops_weights, axis=-1).astype(jnp.int32)           # (S,)
    if gumbel_training:
        op_scale = jnp.take_along_axis(ops_weights, op_idx[:, None], axis=1)[:, 0]
    else:
        op_scale = jnp.ones((num_states,), jnp.float32)
    op_scale = op_scale.astype(jnp.float32)

    basis = jnp.asarray(_BASIS)                                  # (8, 6)
    coef = (op_scale[:, None] * basis[op_idx]).reshape(-1)        # (S*6,) f32

    # --- tile size & VMEM limit ----------------------------------------------
    auto_tile, vmem_limit = _vmem_plan(N, C, np.dtype(logits.dtype).itemsize)
    if tile_n is None:
        tile_n = auto_tile
    tile_n = max(128, (int(tile_n) // 128) * 128)

    Np = ((N + tile_n - 1) // tile_n) * tile_n
    num_tiles = Np // tile_n

    # --- lane-dense layout: classes on sublanes, samples on lanes -------------
    # (native dtype is kept on the HBM side; the f32 cast happens in-kernel.)
    logits_t = logits.T                                   # (C, N)
    target_t = target.reshape(1, N).astype(jnp.int32)     # (1, N)
    if Np != N:
        logits_t = jnp.pad(logits_t, ((0, 0), (0, Np - N)))
        target_t = jnp.pad(target_t, ((0, 0), (0, Np - N)))

    n_valid = jnp.array([N], jnp.int32)

    kernel = functools.partial(_loss_kernel, num_states=num_states,
                               noCEFormat=noCEFormat)

    grid_spec = pltpu.PrefetchScalarGridSpec(
        num_scalar_prefetch=2,
        grid=(num_tiles,),
        in_specs=[
            pl.BlockSpec((C, tile_n), lambda i, coef, nv: (0, i)),
            pl.BlockSpec((1, tile_n), lambda i, coef, nv: (0, i)),
        ],
        out_specs=[
            pl.BlockSpec((1, 8, 128), lambda i, coef, nv: (i, 0, 0)),
            pl.BlockSpec((1, 8, 128), lambda i, coef, nv: (i, 0, 0)),
        ],
    )

    loss_parts, nll_parts = pl.pallas_call(
        kernel,
        grid_spec=grid_spec,
        out_shape=(jax.ShapeDtypeStruct((num_tiles, 8, 128), jnp.float32),
                   jax.ShapeDtypeStruct((num_tiles, 8, 128), jnp.float32)),
        compiler_params=pltpu.CompilerParams(
            dimension_semantics=("parallel",),
            vmem_limit_bytes=vmem_limit),
    )(coef, n_valid, logits_t, target_t)

    loss_sum = jnp.sum(loss_parts[:, 0, 0])
    nll_sum = jnp.sum(nll_parts[:, 0, 0])
    return loss_sum, nll_sum


def reference_forward(logits, target, op_idx, op_scale, noCEFormat=True):
    """Pure-JAX mirror of the PyTorch forward (given the selected ops)."""
    logp = jax.nn.log_softmax(logits.astype(jnp.float32), axis=-1)
    sm = jnp.exp(logp)
    logp_k = jnp.take_along_axis(logp, target[:, None], axis=1)[:, 0]
    p_k = jnp.exp(logp_k)
    mask = (sm < p_k[:, None]).astype(jnp.float32)
    p_j = jnp.max(mask * sm, axis=-1)
    s0, s1 = p_k, p_j
    for i in range(op_idx.shape[0]):
        ii = int(op_idx[i])
        cands = _op_candidates(s0, s1)
        s0, s1 = s1, float(op_scale[i]) * cands[ii]
    nll = -logp_k
    loss = s1 if noCEFormat else s1 * nll
    return loss.sum(), nll.sum()


if __name__ == "__main__":
    key = jax.random.PRNGKey(0)
    k1, k2, k3, k4 = jax.random.split(key, 4)

    # Small shapes consistent with the forward: logits (N, C), target (N,).
    # N is deliberately not a multiple of the tile so the padding/mask path
    # and the multi-tile (per-tile partial sums) path are both exercised.
    N, C = 300, 32
    NUM_STATES, TAU = 14, 0.1

    logits = jax.random.normal(k1, (N, C), jnp.float32)
    target = jax.random.randint(k2, (N,), 0, C, jnp.int32)

    # Deterministic "parameters": alphas_ops = 0.001 * randn, g = gumbel noise.
    alphas_ops = 0.001 * jax.random.normal(k3, (NUM_STATES, NUM_OPS), jnp.float32)
    u = jax.random.uniform(k4, (NUM_STATES, NUM_OPS), jnp.float32,
                           minval=1e-6, maxval=1.0 - 1e-6)
    g_ops = -jnp.log(-jnp.log(u))

    loss_sum, nll_sum = loss_func_forward(
        logits, target, alphas_ops, g_ops,
        tau=TAU, noCEFormat=True, gumbel_training=True, tile_n=128)
    jax.block_until_ready((loss_sum, nll_sum))

    # Cross-check against a pure-JAX reference.
    ops_weights = jax.nn.softmax((alphas_ops + g_ops) / TAU, axis=-1)
    op_idx = jnp.argmax(ops_weights, axis=-1).astype(jnp.int32)
    op_scale = jnp.take_along_axis(ops_weights, op_idx[:, None], axis=1)[:, 0]
    ref_loss, ref_nll = reference_forward(logits, target, op_idx, op_scale,
                                          noCEFormat=True)

    assert np.allclose(np.asarray(loss_sum), np.asarray(ref_loss),
                       rtol=3e-4, atol=1e-3, equal_nan=True), (loss_sum, ref_loss)
    assert np.allclose(np.asarray(nll_sum), np.asarray(ref_nll),
                       rtol=3e-4, atol=1e-3, equal_nan=True), (nll_sum, ref_nll)

    print("KERNEL_OK")
</pallas_src>

<mosaic_0001>
module attributes {stable_mosaic.version = 11 : i64} {
  func.func @_loss_kernel(%arg0: i32, %arg1: memref<84xf32, #tpu.memory_space<smem>>, %arg2: memref<1xi32, #tpu.memory_space<smem>>, %arg3: memref<32x128xf32, #tpu.memory_space<vmem>>, %arg4: memref<1x128xi32, #tpu.memory_space<vmem>>, %arg5: memref<1x8x128xf32, #tpu.memory_space<vmem>>, %arg6: memref<1x8x128xf32, #tpu.memory_space<vmem>>) attributes {dimension_semantics = [#tpu.dimension_semantics<parallel>], iteration_bounds = array<i64: 3>, scalar_prefetch = 2 : i64, scratch_operands = 0 : i64, tpu.core_type = #tpu.core_type<tc>, window_params = [{transform_indices = @transform_0, window_bounds = array<i64: 32, 128>}, {transform_indices = @transform_1, window_bounds = array<i64: 1, 128>}, {transform_indices = @transform_2, window_bounds = array<i64: 1, 8, 128>}, {transform_indices = @transform_3, window_bounds = array<i64: 1, 8, 128>}]} {
    %c0 = arith.constant 0 : index
    %c0_0 = arith.constant 0 : index
    %0 = vector.load %arg3[%c0, %c0_0] : memref<32x128xf32, #tpu.memory_space<vmem>>, vector<32x128xf32>
    %c0_1 = arith.constant 0 : index
    %c0_2 = arith.constant 0 : index
    %1 = vector.load %arg4[%c0_1, %c0_2] : memref<1x128xi32, #tpu.memory_space<vmem>>, vector<1x128xi32>
    %cst = arith.constant dense<0xFF800000> : vector<128xf32>
    %2 = vector.multi_reduction <maximumf>, %0, %cst [0] : vector<32x128xf32> to vector<128xf32>
    %3 = vector.shape_cast %2 : vector<128xf32> to vector<1x128xf32>
    %4 = vector.broadcast %3 : vector<1x128xf32> to vector<32x128xf32>
    %5 = arith.subf %0, %4 : vector<32x128xf32>
    %6 = math.exp %5 : vector<32x128xf32>
    %cst_3 = arith.constant dense<0.000000e+00> : vector<128xf32>
    %7 = vector.multi_reduction <add>, %6, %cst_3 [0] : vector<32x128xf32> to vector<128xf32>
    %8 = vector.shape_cast %7 : vector<128xf32> to vector<1x128xf32>
    %9 = math.log %8 : vector<1x128xf32>
    %10 = tpu.iota {dimensions = array<i32: 0>} : vector<32x1xi32>
    %11 = vector.broadcast %10 : vector<32x1xi32> to vector<32x128xi32>
    %12 = vector.broadcast %1 : vector<1x128xi32> to vector<32x128xi32>
    %13 = arith.cmpi eq, %11, %12 : vector<32x128xi32>
    %cst_4 = arith.constant -1.000000e+30 : f32
    %14 = vector.broadcast %cst_4 : f32 to vector<32x128xf32>
    %15 = arith.select %13, %5, %14 : vector<32x128xi1>, vector<32x128xf32>
    %cst_5 = arith.constant dense<0xFF800000> : vector<128xf32>
    %16 = vector.multi_reduction <maximumf>, %15, %cst_5 [0] : vector<32x128xf32> to vector<128xf32>
    %17 = vector.shape_cast %16 : vector<128xf32> to vector<1x128xf32>
    %18 = vector.broadcast %17 : vector<1x128xf32> to vector<32x128xf32>
    %19 = arith.cmpf olt, %5, %18 : vector<32x128xf32>
    %cst_6 = arith.constant -1.000000e+30 : f32
    %20 = vector.broadcast %cst_6 : f32 to vector<32x128xf32>
    %21 = arith.select %19, %5, %20 : vector<32x128xi1>, vector<32x128xf32>
    %cst_7 = arith.constant dense<0xFF800000> : vector<128xf32>
    %22 = vector.multi_reduction <maximumf>, %21, %cst_7 [0] : vector<32x128xf32> to vector<128xf32>
    %23 = vector.shape_cast %22 : vector<128xf32> to vector<1x128xf32>
    %24 = arith.subf %17, %9 : vector<1x128xf32>
    %25 = math.exp %24 : vector<1x128xf32>
    %26 = arith.subf %23, %9 : vector<1x128xf32>
    %27 = math.exp %26 : vector<1x128xf32>
    %c0_8 = arith.constant 0 : index
    %28 = memref.load %arg1[%c0_8] : memref<84xf32, #tpu.memory_space<smem>>
    %c1 = arith.constant 1 : index
    %29 = memref.load %arg1[%c1] : memref<84xf32, #tpu.memory_space<smem>>
    %c2 = arith.constant 2 : index
    %30 = memref.load %arg1[%c2] : memref<84xf32, #tpu.memory_space<smem>>
    %c3 = arith.constant 3 : index
    %31 = memref.load %arg1[%c3] : memref<84xf32, #tpu.memory_space<smem>>
    %c4 = arith.constant 4 : index
    %32 = memref.load %arg1[%c4] : memref<84xf32, #tpu.memory_space<smem>>
    %c5 = arith.constant 5 : index
    %33 = memref.load %arg1[%c5] : memref<84xf32, #tpu.memory_space<smem>>
    %34 = vector.broadcast %29 : f32 to vector<1x128xf32>
    %35 = arith.mulf %34, %25 : vector<1x128xf32>
    %36 = vector.broadcast %28 : f32 to vector<1x128xf32>
    %37 = arith.addf %36, %35 : vector<1x128xf32>
    %38 = vector.broadcast %30 : f32 to vector<1x128xf32>
    %39 = arith.mulf %38, %27 : vector<1x128xf32>
    %40 = arith.addf %37, %39 : vector<1x128xf32>
    %41 = arith.mulf %25, %27 : vector<1x128xf32>
    %42 = vector.broadcast %31 : f32 to vector<1x128xf32>
    %43 = arith.mulf %42, %41 : vector<1x128xf32>
    %44 = arith.addf %40, %43 : vector<1x128xf32>
    %45 = arith.mulf %25, %25 : vector<1x128xf32>
    %46 = vector.broadcast %32 : f32 to vector<1x128xf32>
    %47 = arith.mulf %46, %45 : vector<1x128xf32>
    %48 = arith.addf %44, %47 : vector<1x128xf32>
    %49 = math.absf %25 : vector<1x128xf32>
    %50 = vector.broadcast %33 : f32 to vector<1x128xf32>
    %51 = arith.mulf %50, %49 : vector<1x128xf32>
    %52 = arith.addf %48, %51 : vector<1x128xf32>
    %c6 = arith.constant 6 : index
    %53 = memref.load %arg1[%c6] : memref<84xf32, #tpu.memory_space<smem>>
    %c7 = arith.constant 7 : index
    %54 = memref.load %arg1[%c7] : memref<84xf32, #tpu.memory_space<smem>>
    %c8 = arith.constant 8 : index
    %55 = memref.load %arg1[%c8] : memref<84xf32, #tpu.memory_space<smem>>
    %c9 = arith.constant 9 : index
    %56 = memref.load %arg1[%c9] : memref<84xf32, #tpu.memory_space<smem>>
    %c10 = arith.constant 10 : index
    %57 = memref.load %arg1[%c10] : memref<84xf32, #tpu.memory_space<smem>>
    %c11 = arith.constant 11 : index
    %58 = memref.load %arg1[%c11] : memref<84xf32, #tpu.memory_space<smem>>
    %59 = vector.broadcast %54 : f32 to vector<1x128xf32>
    %60 = arith.mulf %59, %27 : vector<1x128xf32>
    %61 = vector.broadcast %53 : f32 to vector<1x128xf32>
    %62 = arith.addf %61, %60 : vector<1x128xf32>
    %63 = vector.broadcast %55 : f32 to vector<1x128xf32>
    %64 = arith.mulf %63, %52 : vector<1x128xf32>
    %65 = arith.addf %62, %64 : vector<1x128xf32>
    %66 = arith.mulf %27, %52 : vector<1x128xf32>
    %67 = vector.broadcast %56 : f32 to vector<1x128xf32>
    %68 = arith.mulf %67, %66 : vector<1x128xf32>
    %69 = arith.addf %65, %68 : vector<1x128xf32>
    %70 = arith.mulf %27, %27 : vector<1x128xf32>
    %71 = vector.broadcast %57 : f32 to vector<1x128xf32>
    %72 = arith.mulf %71, %70 : vector<1x128xf32>
    %73 = arith.addf %69, %72 : vector<1x128xf32>
    %74 = math.absf %27 : vector<1x128xf32>
    %75 = vector.broadcast %58 : f32 to vector<1x128xf32>
    %76 = arith.mulf %75, %74 : vector<1x128xf32>
    %77 = arith.addf %73, %76 : vector<1x128xf32>
    %c12 = arith.constant 12 : index
    %78 = memref.load %arg1[%c12] : memref<84xf32, #tpu.memory_space<smem>>
    %c13 = arith.constant 13 : index
    %79 = memref.load %arg1[%c13] : memref<84xf32, #tpu.memory_space<smem>>
    %c14 = arith.constant 14 : index
    %80 = memref.load %arg1[%c14] : memref<84xf32, #tpu.memory_space<smem>>
    %c15 = arith.constant 15 : index
    %81 = memref.load %arg1[%c15] : memref<84xf32, #tpu.memory_space<smem>>
    %c16 = arith.constant 16 : index
    %82 = memref.load %arg1[%c16] : memref<84xf32, #tpu.memory_space<smem>>
    %c17 = arith.constant 17 : index
    %83 = memref.load %arg1[%c17] : memref<84xf32, #tpu.memory_space<smem>>
    %84 = vector.broadcast %79 : f32 to vector<1x128xf32>
    %85 = arith.mulf %84, %52 : vector<1x128xf32>
    %86 = vector.broadcast %78 : f32 to vector<1x128xf32>
    %87 = arith.addf %86, %85 : vector<1x128xf32>
    %88 = vector.broadcast %80 : f32 to vector<1x128xf32>
    %89 = arith.mulf %88, %77 : vector<1x128xf32>
    %90 = arith.addf %87, %89 : vector<1x128xf32>
    %91 = arith.mulf %52, %77 : vector<1x128xf32>
    %92 = vector.broadcast %81 : f32 to vector<1x128xf32>
    %93 = arith.mulf %92, %91 : vector<1x128xf32>
    %94 = arith.addf %90, %93 : vector<1x128xf32>
    %95 = arith.mulf %52, %52 : vector<1x128xf32>
    %96 = vector.broadcast %82 : f32 to vector<1x128xf32>
    %97 = arith.mulf %96, %95 : vector<1x128xf32>
    %98 = arith.addf %94, %97 : vector<1x128xf32>
    %99 = math.absf %52 : vector<1x128xf32>
    %100 = vector.broadcast %83 : f32 to vector<1x128xf32>
    %101 = arith.mulf %100, %99 : vector<1x128xf32>
    %102 = arith.addf %98, %101 : vector<1x128xf32>
    %c18 = arith.constant 18 : index
    %103 = memref.load %arg1[%c18] : memref<84xf32, #tpu.memory_space<smem>>
    %c19 = arith.constant 19 : index
    %104 = memref.load %arg1[%c19] : memref<84xf32, #tpu.memory_space<smem>>
    %c20 = arith.constant 20 : index
    %105 = memref.load %arg1[%c20] : memref<84xf32, #tpu.memory_space<smem>>
    %c21 = arith.constant 21 : index
    %106 = memref.load %arg1[%c21] : memref<84xf32, #tpu.memory_space<smem>>
    %c22 = arith.constant 22 : index
    %107 = memref.load %arg1[%c22] : memref<84xf32, #tpu.memory_space<smem>>
    %c23 = arith.constant 23 : index
    %108 = memref.load %arg1[%c23] : memref<84xf32, #tpu.memory_space<smem>>
    %109 = vector.broadcast %104 : f32 to vector<1x128xf32>
    %110 = arith.mulf %109, %77 : vector<1x128xf32>
    %111 = vector.broadcast %103 : f32 to vector<1x128xf32>
    %112 = arith.addf %111, %110 : vector<1x128xf32>
    %113 = vector.broadcast %105 : f32 to vector<1x128xf32>
    %114 = arith.mulf %113, %102 : vector<1x128xf32>
    %115 = arith.addf %112, %114 : vector<1x128xf32>
    %116 = arith.mulf %77, %102 : vector<1x128xf32>
    %117 = vector.broadcast %106 : f32 to vector<1x128xf32>
    %118 = arith.mulf %117, %116 : vector<1x128xf32>
    %119 = arith.addf %115, %118 : vector<1x128xf32>
    %120 = arith.mulf %77, %77 : vector<1x128xf32>
    %121 = vector.broadcast %107 : f32 to vector<1x128xf32>
    %122 = arith.mulf %121, %120 : vector<1x128xf32>
    %123 = arith.addf %119, %122 : vector<1x128xf32>
    %124 = math.absf %77 : vector<1x128xf32>
    %125 = vector.broadcast %108 : f32 to vector<1x128xf32>
    %126 = arith.mulf %125, %124 : vector<1x128xf32>
    %127 = arith.addf %123, %126 : vector<1x128xf32>
    %c24 = arith.constant 24 : index
    %128 = memref.load %arg1[%c24] : memref<84xf32, #tpu.memory_space<smem>>
    %c25 = arith.constant 25 : index
    %129 = memref.load %arg1[%c25] : memref<84xf32, #tpu.memory_space<smem>>
    %c26 = arith.constant 26 : index
    %130 = memref.load %arg1[%c26] : memref<84xf32, #tpu.memory_space<smem>>
    %c27 = arith.constant 27 : index
    %131 = memref.load %arg1[%c27] : memref<84xf32, #tpu.memory_space<smem>>
    %c28 = arith.constant 28 : index
    %132 = memref.load %arg1[%c28] : memref<84xf32, #tpu.memory_space<smem>>
    %c29 = arith.constant 29 : index
    %133 = memref.load %arg1[%c29] : memref<84xf32, #tpu.memory_space<smem>>
    %134 = vector.broadcast %129 : f32 to vector<1x128xf32>
    %135 = arith.mulf %134, %102 : vector<1x128xf32>
    %136 = vector.broadcast %128 : f32 to vector<1x128xf32>
    %137 = arith.addf %136, %135 : vector<1x128xf32>
    %138 = vector.broadcast %130 : f32 to vector<1x128xf32>
    %139 = arith.mulf %138, %127 : vector<1x128xf32>
    %140 = arith.addf %137, %139 : vector<1x128xf32>
    %141 = arith.mulf %102, %127 : vector<1x128xf32>
    %142 = vector.broadcast %131 : f32 to vector<1x128xf32>
    %143 = arith.mulf %142, %141 : vector<1x128xf32>
    %144 = arith.addf %140, %143 : vector<1x128xf32>
    %145 = arith.mulf %102, %102 : vector<1x128xf32>
    %146 = vector.broadcast %132 : f32 to vector<1x128xf32>
    %147 = arith.mulf %146, %145 : vector<1x128xf32>
    %148 = arith.addf %144, %147 : vector<1x128xf32>
    %149 = math.absf %102 : vector<1x128xf32>
    %150 = vector.broadcast %133 : f32 to vector<1x128xf32>
    %151 = arith.mulf %150, %149 : vector<1x128xf32>
    %152 = arith.addf %148, %151 : vector<1x128xf32>
    %c30 = arith.constant 30 : index
    %153 = memref.load %arg1[%c30] : memref<84xf32, #tpu.memory_space<smem>>
    %c31 = arith.constant 31 : index
    %154 = memref.load %arg1[%c31] : memref<84xf32, #tpu.memory_space<smem>>
    %c32 = arith.constant 32 : index
    %155 = memref.load %arg1[%c32] : memref<84xf32, #tpu.memory_space<smem>>
    %c33 = arith.constant 33 : index
    %156 = memref.load %arg1[%c33] : memref<84xf32, #tpu.memory_space<smem>>
    %c34 = arith.constant 34 : index
    %157 = memref.load %arg1[%c34] : memref<84xf32, #tpu.memory_space<smem>>
    %c35 = arith.constant 35 : index
    %158 = memref.load %arg1[%c35] : memref<84xf32, #tpu.memory_space<smem>>
    %159 = vector.broadcast %154 : f32 to vector<1x128xf32>
    %160 = arith.mulf %159, %127 : vector<1x128xf32>
    %161 = vector.broadcast %153 : f32 to vector<1x128xf32>
    %162 = arith.addf %161, %160 : vector<1x128xf32>
    %163 = vector.broadcast %155 : f32 to vector<1x128xf32>
    %164 = arith.mulf %163, %152 : vector<1x128xf32>
    %165 = arith.addf %162, %164 : vector<1x128xf32>
    %166 = arith.mulf %127, %152 : vector<1x128xf32>
    %167 = vector.broadcast %156 : f32 to vector<1x128xf32>
    %168 = arith.mulf %167, %166 : vector<1x128xf32>
    %169 = arith.addf %165, %168 : vector<1x128xf32>
    %170 = arith.mulf %127, %127 : vector<1x128xf32>
    %171 = vector.broadcast %157 : f32 to vector<1x128xf32>
    %172 = arith.mulf %171, %170 : vector<1x128xf32>
    %173 = arith.addf %169, %172 : vector<1x128xf32>
    %174 = math.absf %127 : vector<1x128xf32>
    %175 = vector.broadcast %158 : f32 to vector<1x128xf32>
    %176 = arith.mulf %175, %174 : vector<1x128xf32>
    %177 = arith.addf %173, %176 : vector<1x128xf32>
    %c36 = arith.constant 36 : index
    %178 = memref.load %arg1[%c36] : memref<84xf32, #tpu.memory_space<smem>>
    %c37 = arith.constant 37 : index
    %179 = memref.load %arg1[%c37] : memref<84xf32, #tpu.memory_space<smem>>
    %c38 = arith.constant 38 : index
    %180 = memref.load %arg1[%c38] : memref<84xf32, #tpu.memory_space<smem>>
    %c39 = arith.constant 39 : index
    %181 = memref.load %arg1[%c39] : memref<84xf32, #tpu.memory_space<smem>>
    %c40 = arith.constant 40 : index
    %182 = memref.load %arg1[%c40] : memref<84xf32, #tpu.memory_space<smem>>
    %c41 = arith.constant 41 : index
    %183 = memref.load %arg1[%c41] : memref<84xf32, #tpu.memory_space<smem>>
    %184 = vector.broadcast %179 : f32 to vector<1x128xf32>
    %185 = arith.mulf %184, %152 : vector<1x128xf32>
    %186 = vector.broadcast %178 : f32 to vector<1x128xf32>
    %187 = arith.addf %186, %185 : vector<1x128xf32>
    %188 = vector.broadcast %180 : f32 to vector<1x128xf32>
    %189 = arith.mulf %188, %177 : vector<1x128xf32>
    %190 = arith.addf %187, %189 : vector<1x128xf32>
    %191 = arith.mulf %152, %177 : vector<1x128xf32>
    %192 = vector.broadcast %181 : f32 to vector<1x128xf32>
    %193 = arith.mulf %192, %191 : vector<1x128xf32>
    %194 = arith.addf %190, %193 : vector<1x128xf32>
    %195 = arith.mulf %152, %152 : vector<1x128xf32>
    %196 = vector.broadcast %182 : f32 to vector<1x128xf32>
    %197 = arith.mulf %196, %195 : vector<1x128xf32>
    %198 = arith.addf %194, %197 : vector<1x128xf32>
    %199 = math.absf %152 : vector<1x128xf32>
    %200 = vector.broadcast %183 : f32 to vector<1x128xf32>
    %201 = arith.mulf %200, %199 : vector<1x128xf32>
    %202 = arith.addf %198, %201 : vector<1x128xf32>
    %c42 = arith.constant 42 : index
    %203 = memref.load %arg1[%c42] : memref<84xf32, #tpu.memory_space<smem>>
    %c43 = arith.constant 43 : index
    %204 = memref.load %arg1[%c43] : memref<84xf32, #tpu.memory_space<smem>>
    %c44 = arith.constant 44 : index
    %205 = memref.load %arg1[%c44] : memref<84xf32, #tpu.memory_space<smem>>
    %c45 = arith.constant 45 : index
    %206 = memref.load %arg1[%c45] : memref<84xf32, #tpu.memory_space<smem>>
    %c46 = arith.constant 46 : index
    %207 = memref.load %arg1[%c46] : memref<84xf32, #tpu.memory_space<smem>>
    %c47 = arith.constant 47 : index
    %208 = memref.load %arg1[%c47] : memref<84xf32, #tpu.memory_space<smem>>
    %209 = vector.broadcast %204 : f32 to vector<1x128xf32>
    %210 = arith.mulf %209, %177 : vector<1x128xf32>
    %211 = vector.broadcast %203 : f32 to vector<1x128xf32>
    %212 = arith.addf %211, %210 : vector<1x128xf32>
    %213 = vector.broadcast %205 : f32 to vector<1x128xf32>
    %214 = arith.mulf %213, %202 : vector<1x128xf32>
    %215 = arith.addf %212, %214 : vector<1x128xf32>
    %216 = arith.mulf %177, %202 : vector<1x128xf32>
    %217 = vector.broadcast %206 : f32 to vector<1x128xf32>
    %218 = arith.mulf %217, %216 : vector<1x128xf32>
    %219 = arith.addf %215, %218 : vector<1x128xf32>
    %220 = arith.mulf %177, %177 : vector<1x128xf32>
    %221 = vector.broadcast %207 : f32 to vector<1x128xf32>
    %222 = arith.mulf %221, %220 : vector<1x128xf32>
    %223 = arith.addf %219, %222 : vector<1x128xf32>
    %224 = math.absf %177 : vector<1x128xf32>
    %225 = vector.broadcast %208 : f32 to vector<1x128xf32>
    %226 = arith.mulf %225, %224 : vector<1x128xf32>
    %227 = arith.addf %223, %226 : vector<1x128xf32>
    %c48 = arith.constant 48 : index
    %228 = memref.load %arg1[%c48] : memref<84xf32, #tpu.memory_space<smem>>
    %c49 = arith.constant 49 : index
    %229 = memref.load %arg1[%c49] : memref<84xf32, #tpu.memory_space<smem>>
    %c50 = arith.constant 50 : index
    %230 = memref.load %arg1[%c50] : memref<84xf32, #tpu.memory_space<smem>>
    %c51 = arith.constant 51 : index
    %231 = memref.load %arg1[%c51] : memref<84xf32, #tpu.memory_space<smem>>
    %c52 = arith.constant 52 : index
    %232 = memref.load %arg1[%c52] : memref<84xf32, #tpu.memory_space<smem>>
    %c53 = arith.constant 53 : index
    %233 = memref.load %arg1[%c53] : memref<84xf32, #tpu.memory_space<smem>>
    %234 = vector.broadcast %229 : f32 to vector<1x128xf32>
    %235 = arith.mulf %234, %202 : vector<1x128xf32>
    %236 = vector.broadcast %228 : f32 to vector<1x128xf32>
    %237 = arith.addf %236, %235 : vector<1x128xf32>
    %238 = vector.broadcast %230 : f32 to vector<1x128xf32>
    %239 = arith.mulf %238, %227 : vector<1x128xf32>
    %240 = arith.addf %237, %239 : vector<1x128xf32>
    %241 = arith.mulf %202, %227 : vector<1x128xf32>
    %242 = vector.broadcast %231 : f32 to vector<1x128xf32>
    %243 = arith.mulf %242, %241 : vector<1x128xf32>
    %244 = arith.addf %240, %243 : vector<1x128xf32>
    %245 = arith.mulf %202, %202 : vector<1x128xf32>
    %246 = vector.broadcast %232 : f32 to vector<1x128xf32>
    %247 = arith.mulf %246, %245 : vector<1x128xf32>
    %248 = arith.addf %244, %247 : vector<1x128xf32>
    %249 = math.absf %202 : vector<1x128xf32>
    %250 = vector.broadcast %233 : f32 to vector<1x128xf32>
    %251 = arith.mulf %250, %249 : vector<1x128xf32>
    %252 = arith.addf %248, %251 : vector<1x128xf32>
    %c54 = arith.constant 54 : index
    %253 = memref.load %arg1[%c54] : memref<84xf32, #tpu.memory_space<smem>>
    %c55 = arith.constant 55 : index
    %254 = memref.load %arg1[%c55] : memref<84xf32, #tpu.memory_space<smem>>
    %c56 = arith.constant 56 : index
    %255 = memref.load %arg1[%c56] : memref<84xf32, #tpu.memory_space<smem>>
    %c57 = arith.constant 57 : index
    %256 = memref.load %arg1[%c57] : memref<84xf32, #tpu.memory_space<smem>>
    %c58 = arith.constant 58 : index
    %257 = memref.load %arg1[%c58] : memref<84xf32, #tpu.memory_space<smem>>
    %c59 = arith.constant 59 : index
    %258 = memref.load %arg1[%c59] : memref<84xf32, #tpu.memory_space<smem>>
    %259 = vector.broadcast %254 : f32 to vector<1x128xf32>
    %260 = arith.mulf %259, %227 : vector<1x128xf32>
    %261 = vector.broadcast %253 : f32 to vector<1x128xf32>
    %262 = arith.addf %261, %260 : vector<1x128xf32>
    %263 = vector.broadcast %255 : f32 to vector<1x128xf32>
    %264 = arith.mulf %263, %252 : vector<1x128xf32>
    %265 = arith.addf %262, %264 : vector<1x128xf32>
    %266 = arith.mulf %227, %252 : vector<1x128xf32>
    %267 = vector.broadcast %256 : f32 to vector<1x128xf32>
    %268 = arith.mulf %267, %266 : vector<1x128xf32>
    %269 = arith.addf %265, %268 : vector<1x128xf32>
    %270 = arith.mulf %227, %227 : vector<1x128xf32>
    %271 = vector.broadcast %257 : f32 to vector<1x128xf32>
    %272 = arith.mulf %271, %270 : vector<1x128xf32>
    %273 = arith.addf %269, %272 : vector<1x128xf32>
    %274 = math.absf %227 : vector<1x128xf32>
    %275 = vector.broadcast %258 : f32 to vector<1x128xf32>
    %276 = arith.mulf %275, %274 : vector<1x128xf32>
    %277 = arith.addf %273, %276 : vector<1x128xf32>
    %c60 = arith.constant 60 : index
    %278 = memref.load %arg1[%c60] : memref<84xf32, #tpu.memory_space<smem>>
    %c61 = arith.constant 61 : index
    %279 = memref.load %arg1[%c61] : memref<84xf32, #tpu.memory_space<smem>>
    %c62 = arith.constant 62 : index
    %280 = memref.load %arg1[%c62] : memref<84xf32, #tpu.memory_space<smem>>
    %c63 = arith.constant 63 : index
    %281 = memref.load %arg1[%c63] : memref<84xf32, #tpu.memory_space<smem>>
    %c64 = arith.constant 64 : index
    %282 = memref.load %arg1[%c64] : memref<84xf32, #tpu.memory_space<smem>>
    %c65 = arith.constant 65 : index
    %283 = memref.load %arg1[%c65] : memref<84xf32, #tpu.memory_space<smem>>
    %284 = vector.broadcast %279 : f32 to vector<1x128xf32>
    %285 = arith.mulf %284, %252 : vector<1x128xf32>
    %286 = vector.broadcast %278 : f32 to vector<1x128xf32>
    %287 = arith.addf %286, %285 : vector<1x128xf32>
    %288 = vector.broadcast %280 : f32 to vector<1x128xf32>
    %289 = arith.mulf %288, %277 : vector<1x128xf32>
    %290 = arith.addf %287, %289 : vector<1x128xf32>
    %291 = arith.mulf %252, %277 : vector<1x128xf32>
    %292 = vector.broadcast %281 : f32 to vector<1x128xf32>
    %293 = arith.mulf %292, %291 : vector<1x128xf32>
    %294 = arith.addf %290, %293 : vector<1x128xf32>
    %295 = arith.mulf %252, %252 : vector<1x128xf32>
    %296 = vector.broadcast %282 : f32 to vector<1x128xf32>
    %297 = arith.mulf %296, %295 : vector<1x128xf32>
    %298 = arith.addf %294, %297 : vector<1x128xf32>
    %299 = math.absf %252 : vector<1x128xf32>
    %300 = vector.broadcast %283 : f32 to vector<1x128xf32>
    %301 = arith.mulf %300, %299 : vector<1x128xf32>
    %302 = arith.addf %298, %301 : vector<1x128xf32>
    %c66 = arith.constant 66 : index
    %303 = memref.load %arg1[%c66] : memref<84xf32, #tpu.memory_space<smem>>
    %c67 = arith.constant 67 : index
    %304 = memref.load %arg1[%c67] : memref<84xf32, #tpu.memory_space<smem>>
    %c68 = arith.constant 68 : index
    %305 = memref.load %arg1[%c68] : memref<84xf32, #tpu.memory_space<smem>>
    %c69 = arith.constant 69 : index
    %306 = memref.load %arg1[%c69] : memref<84xf32, #tpu.memory_space<smem>>
    %c70 = arith.constant 70 : index
    %307 = memref.load %arg1[%c70] : memref<84xf32, #tpu.memory_space<smem>>
    %c71 = arith.constant 71 : index
    %308 = memref.load %arg1[%c71] : memref<84xf32, #tpu.memory_space<smem>>
    %309 = vector.broadcast %304 : f32 to vector<1x128xf32>
    %310 = arith.mulf %309, %277 : vector<1x128xf32>
    %311 = vector.broadcast %303 : f32 to vector<1x128xf32>
    %312 = arith.addf %311, %310 : vector<1x128xf32>
    %313 = vector.broadcast %305 : f32 to vector<1x128xf32>
    %314 = arith.mulf %313, %302 : vector<1x128xf32>
    %315 = arith.addf %312, %314 : vector<1x128xf32>
    %316 = arith.mulf %277, %302 : vector<1x128xf32>
    %317 = vector.broadcast %306 : f32 to vector<1x128xf32>
    %318 = arith.mulf %317, %316 : vector<1x128xf32>
    %319 = arith.addf %315, %318 : vector<1x128xf32>
    %320 = arith.mulf %277, %277 : vector<1x128xf32>
    %321 = vector.broadcast %307 : f32 to vector<1x128xf32>
    %322 = arith.mulf %321, %320 : vector<1x128xf32>
    %323 = arith.addf %319, %322 : vector<1x128xf32>
    %324 = math.absf %277 : vector<1x128xf32>
    %325 = vector.broadcast %308 : f32 to vector<1x128xf32>
    %326 = arith.mulf %325, %324 : vector<1x128xf32>
    %327 = arith.addf %323, %326 : vector<1x128xf32>
    %c72 = arith.constant 72 : index
    %328 = memref.load %arg1[%c72] : memref<84xf32, #tpu.memory_space<smem>>
    %c73 = arith.constant 73 : index
    %329 = memref.load %arg1[%c73] : memref<84xf32, #tpu.memory_space<smem>>
    %c74 = arith.constant 74 : index
    %330 = memref.load %arg1[%c74] : memref<84xf32, #tpu.memory_space<smem>>
    %c75 = arith.constant 75 : index
    %331 = memref.load %arg1[%c75] : memref<84xf32, #tpu.memory_space<smem>>
    %c76 = arith.constant 76 : index
    %332 = memref.load %arg1[%c76] : memref<84xf32, #tpu.memory_space<smem>>
    %c77 = arith.constant 77 : index
    %333 = memref.load %arg1[%c77] : memref<84xf32, #tpu.memory_space<smem>>
    %334 = vector.broadcast %329 : f32 to vector<1x128xf32>
    %335 = arith.mulf %334, %302 : vector<1x128xf32>
    %336 = vector.broadcast %328 : f32 to vector<1x128xf32>
    %337 = arith.addf %336, %335 : vector<1x128xf32>
    %338 = vector.broadcast %330 : f32 to vector<1x128xf32>
    %339 = arith.mulf %338, %327 : vector<1x128xf32>
    %340 = arith.addf %337, %339 : vector<1x128xf32>
    %341 = arith.mulf %302, %327 : vector<1x128xf32>
    %342 = vector.broadcast %331 : f32 to vector<1x128xf32>
    %343 = arith.mulf %342, %341 : vector<1x128xf32>
    %344 = arith.addf %340, %343 : vector<1x128xf32>
    %345 = arith.mulf %302, %302 : vector<1x128xf32>
    %346 = vector.broadcast %332 : f32 to vector<1x128xf32>
    %347 = arith.mulf %346, %345 : vector<1x128xf32>
    %348 = arith.addf %344, %347 : vector<1x128xf32>
    %349 = math.absf %302 : vector<1x128xf32>
    %350 = vector.broadcast %333 : f32 to vector<1x128xf32>
    %351 = arith.mulf %350, %349 : vector<1x128xf32>
    %352 = arith.addf %348, %351 : vector<1x128xf32>
    %c78 = arith.constant 78 : index
    %353 = memref.load %arg1[%c78] : memref<84xf32, #tpu.memory_space<smem>>
    %c79 = arith.constant 79 : index
    %354 = memref.load %arg1[%c79] : memref<84xf32, #tpu.memory_space<smem>>
    %c80 = arith.constant 80 : index
    %355 = memref.load %arg1[%c80] : memref<84xf32, #tpu.memory_space<smem>>
    %c81 = arith.constant 81 : index
    %356 = memref.load %arg1[%c81] : memref<84xf32, #tpu.memory_space<smem>>
    %c82 = arith.constant 82 : index
    %357 = memref.load %arg1[%c82] : memref<84xf32, #tpu.memory_space<smem>>
    %c83 = arith.constant 83 : index
    %358 = memref.load %arg1[%c83] : memref<84xf32, #tpu.memory_space<smem>>
    %359 = vector.broadcast %354 : f32 to vector<1x128xf32>
    %360 = arith.mulf %359, %327 : vector<1x128xf32>
    %361 = vector.broadcast %353 : f32 to vector<1x128xf32>
    %362 = arith.addf %361, %360 : vector<1x128xf32>
    %363 = vector.broadcast %355 : f32 to vector<1x128xf32>
    %364 = arith.mulf %363, %352 : vector<1x128xf32>
    %365 = arith.addf %362, %364 : vector<1x128xf32>
    %366 = arith.mulf %327, %352 : vector<1x128xf32>
    %367 = vector.broadcast %356 : f32 to vector<1x128xf32>
    %368 = arith.mulf %367, %366 : vector<1x128xf32>
    %369 = arith.addf %365, %368 : vector<1x128xf32>
    %370 = arith.mulf %327, %327 : vector<1x128xf32>
    %371 = vector.broadcast %357 : f32 to vector<1x128xf32>
    %372 = arith.mulf %371, %370 : vector<1x128xf32>
    %373 = arith.addf %369, %372 : vector<1x128xf32>
    %374 = math.absf %327 : vector<1x128xf32>
    %375 = vector.broadcast %358 : f32 to vector<1x128xf32>
    %376 = arith.mulf %375, %374 : vector<1x128xf32>
    %377 = arith.addf %373, %376 : vector<1x128xf32>
    %cst_9 = arith.constant 0.000000e+00 : f32
    %378 = vector.broadcast %cst_9 : f32 to vector<1x128xf32>
    %379 = arith.subf %378, %24 : vector<1x128xf32>
    %380 = tpu.iota {dimensions = array<i32: 1>} : vector<1x128xi32>
    %c128_i32 = arith.constant 128 : i32
    %381 = arith.muli %arg0, %c128_i32 : i32
    %382 = vector.broadcast %381 : i32 to vector<1x128xi32>
    %383 = arith.addi %382, %380 : vector<1x128xi32>
    %c0_10 = arith.constant 0 : index
    %384 = memref.load %arg2[%c0_10] : memref<1xi32, #tpu.memory_space<smem>>
    %385 = vector.broadcast %384 : i32 to vector<1x128xi32>
    %386 = arith.cmpi slt, %383, %385 : vector<1x128xi32>
    %cst_11 = arith.constant 0.000000e+00 : f32
    %387 = vector.broadcast %cst_11 : f32 to vector<1x128xf32>
    %388 = arith.select %386, %377, %387 : vector<1x128xi1>, vector<1x128xf32>
    %389 = vector.shape_cast %388 : vector<1x128xf32> to vector<1x1x128xf32>
    %cst_12 = arith.constant dense<0.000000e+00> : vector<1xf32>
    %390 = vector.multi_reduction <add>, %389, %cst_12 [1, 2] : vector<1x1x128xf32> to vector<1xf32>
    %391 = vector.shape_cast %390 : vector<1xf32> to vector<1x1x1xf32>
    %392 = vector.extract %391[0, 0, 0] : f32 from vector<1x1x1xf32>
    %cst_13 = arith.constant 0.000000e+00 : f32
    %393 = vector.broadcast %cst_13 : f32 to vector<1x128xf32>
    %394 = arith.select %386, %379, %393 : vector<1x128xi1>, vector<1x128xf32>
    %395 = vector.shape_cast %394 : vector<1x128xf32> to vector<1x1x128xf32>
    %cst_14 = arith.constant dense<0.000000e+00> : vector<1xf32>
    %396 = vector.multi_reduction <add>, %395, %cst_14 [1, 2] : vector<1x1x128xf32> to vector<1xf32>
    %397 = vector.shape_cast %396 : vector<1xf32> to vector<1x1x1xf32>
    %398 = vector.extract %397[0, 0, 0] : f32 from vector<1x1x1xf32>
    %399 = vector.broadcast %392 : f32 to vector<1x8x128xf32>
    %c0_15 = arith.constant 0 : index
    %c0_16 = arith.constant 0 : index
    %c0_17 = arith.constant 0 : index
    %400 = vector.load %arg5[%c0_15, %c0_16, %c0_17] : memref<1x8x128xf32, #tpu.memory_space<vmem>>, vector<1x8x128xf32>
    tpu.vector_store %arg5[%c0_15, %c0_16, %c0_17], %399 {strides = array<i32>} : memref<1x8x128xf32, #tpu.memory_space<vmem>>, vector<1x8x128xf32>,
    %401 = vector.broadcast %398 : f32 to vector<1x8x128xf32>
    %c0_18 = arith.constant 0 : index
    %c0_19 = arith.constant 0 : index
    %c0_20 = arith.constant 0 : index
    %402 = vector.load %arg6[%c0_18, %c0_19, %c0_20] : memref<1x8x128xf32, #tpu.memory_space<vmem>>, vector<1x8x128xf32>
    tpu.vector_store %arg6[%c0_18, %c0_19, %c0_20], %401 {strides = array<i32>} : memref<1x8x128xf32, #tpu.memory_space<vmem>>, vector<1x8x128xf32>,
    return
  }
  func.func @transform_0(%arg0: i32, %arg1: memref<84xf32, #tpu.memory_space<smem>>, %arg2: memref<1xi32, #tpu.memory_space<smem>>) -> (i32, i32) {
    %c0_i32 = arith.constant 0 : i32
    %c0_i32_0 = arith.constant 0 : i32
    return %c0_i32, %arg0 : i32, i32
  }
  func.func @transform_1(%arg0: i32, %arg1: memref<84xf32, #tpu.memory_space<smem>>, %arg2: memref<1xi32, #tpu.memory_space<smem>>) -> (i32, i32) {
    %c0_i32 = arith.constant 0 : i32
    %c0_i32_0 = arith.constant 0 : i32
    return %c0_i32, %arg0 : i32, i32
  }
  func.func @transform_2(%arg0: i32, %arg1: memref<84xf32, #tpu.memory_space<smem>>, %arg2: memref<1xi32, #tpu.memory_space<smem>>) -> (i32, i32, i32) {
    %c0_i32 = arith.constant 0 : i32
    %c0_i32_0 = arith.constant 0 : i32
    %c0_i32_1 = arith.constant 0 : i32
    return %arg0, %c0_i32, %c0_i32_0 : i32, i32, i32
  }
  func.func @transform_3(%arg0: i32, %arg1: memref<84xf32, #tpu.memory_space<smem>>, %arg2: memref<1xi32, #tpu.memory_space<smem>>) -> (i32, i32, i32) {
    %c0_i32 = arith.constant 0 : i32
    %c0_i32_0 = arith.constant 0 : i32
    %c0_i32_1 = arith.constant 0 : i32
    return %arg0, %c0_i32, %c0_i32_0 : i32, i32, i32
  }
}

</mosaic_0001>

<llo_original>
// kernel: tpu_custom_call.1
$region0: #{tpu_custom_call.1}
  #allocation0 [shape = 'u32[]', space=smem, size = 0x4, offset = 0x4, fixed_abs, tag = 'smem constant byte address 0x4 - core index']
  #allocation1 [shape = 'u32[144,128]{1,0:T(1,128)}', space=vmem, size = 0x12000, scoped, tag = 'internal scratch']
  #allocation2 [shape = 's32[1]{0}', space=sflag, size = 0x4, scoped, tag = 'scoped memory for tpu_custom_call.1']
  #allocation3 [shape = 'u8[512]{0}', space=smem, size = 0x200, scoped, tag = 'prefetched SMEM operand 0']
  #allocation4 [shape = 's32[1]{0:T(128)S(6)}', space=smem, size = 0x200, scoped, tag = 'prefetched SMEM operand 1']
  %s0 = inlined_call_operand.vmem [shape: f32[84], index: 0, kind: input, shape index: {}]
  %s1 = inlined_call_operand.<no memory space> [shape: s32[1], index: 1, kind: input, shape index: {}]
  %s2 = inlined_call_operand.hbm [shape: f32[32,384], index: 2, kind: input, shape index: {}]
  %s3 = inlined_call_operand.vmem [shape: s32[1,384], index: 3, kind: input, shape index: {}]
  %s4 = inlined_call_operand.hbm [shape: f32[3,8,128], index: 4, kind: output, shape index: {0}]
  %s5 = inlined_call_operand.hbm [shape: f32[3,8,128], index: 5, kind: output, shape index: {1}]
  %6 = xla_tuple %s4, %s5
  %s7 = sld [smem:[#allocation0]]
  $region53: #{tpu_custom_call.1} parent=0
    _
  %s9 = ssub.s32 1, %s7
  %s10 = scalar_select 0, %s9, %s7
  %s11 = sshll.u32 %s0, 4
  %s12 = int_to_ptr.vmem [resolvable:$true] %s11
  %14 = dma.vmem_to_smem %s12, 16, [#allocation3], [#allocation2]
  %15 = sst [smem:[#allocation4]] %s1
  %16 = dma.done [#allocation2], 16
  %17 = sfence
  $region1: #{tpu_custom_call.1} parent=0
    #allocation5 [shape = 'u8[32768]{0}', space=vmem, size = 0x8000, scoped, tag = 'input window, operand 2']
    #allocation6 [shape = 's32[2]{0}', space=sflag, size = 0x8, scoped, tag = 'scoped memory for tpu_custom_call.1']
    #allocation7 [shape = 's32[2]{0}', space=sflag, size = 0x8, scoped, tag = 'scoped memory for tpu_custom_call.1']
    #allocation8 [shape = 'u8[8192]{0}', space=vmem, size = 0x2000, scoped, tag = 'output window, operand 0']
    #allocation9 [shape = 'u8[8192]{0}', space=vmem, size = 0x2000, scoped, tag = 'output window, operand 1']
    #allocation10 [shape = 's32[2]{0}', space=sflag, size = 0x8, scoped, tag = 'scoped memory for tpu_custom_call.1']
    %18 = vsyncpa [#allocation6], 0
    %s19 = scalar_lea.sflag [#allocation6], 1
    %20 = vsyncpa %s19, 0
    %21 = vsyncpa [#allocation7], 0
    %s22 = scalar_lea.sflag [#allocation7], 1
    %23 = vsyncpa %s22, 0
    %24 = vsyncpa [#allocation10], 0
    %s25 = scalar_lea.sflag [#allocation10], 1
    %26 = vsyncpa %s25, 0
    loop: start=0, step=1, limit=5
    $region2: #{tpu_custom_call.1} parent=1 // loop_pre_header
      _
    $region3: #{tpu_custom_call.1} parent=1 // loop_header
      %s28 = sphi 0, %s32
      %p29 = scmp.ge.s32.totalorder %s28, 5
      %s38 = sphi 0, %s40
      %s41 = sphi 0, %s38
      %s42 = sphi 0, %s41
      %s58 = sphi 0, %s42
      %s64 = sphi 0, %s66
      %s67 = sphi 0, %s64
      %s68 = sphi 0, %s67
      %s84 = sphi 0, %s68
      %s90 = sphi 0, %s92
      %s93 = sphi 0, %s90
      %s94 = sphi 0, %s93
      %s110 = sphi 0, %s94
      %s116 = sphi 0, %s118
      %s119 = sphi 0, %s116
      %s120 = sphi 0, %s119
      %s136 = sphi 0, %s120
    $region4: #{tpu_custom_call.1} parent=1 // loop_header_branch
      %31 = sbr.rel (%p29) target = $region8
    $region5: #{tpu_custom_call.1} parent=1 // loop_body
      %s33 = ssub.s32 %s28, 1
      %s34 = ssub.s32 %s28, 2
      %s35 = sadd.s32 %s28, 1
      %s36 = ssub.s32 %s28, %s35
      %p37 = scmp.eq.s32.totalorder %s36, 0
      %s39 = sadd.s32 %s38, 1
      %s40 = scalar_select %p37, %s38, %s39
      %p43 = pneg %p37
      %p44 = scmp.eq.s32.totalorder %s28, 2
      %p45 = por %p43, %p44
      %p46 = scmp.ne.s32.totalorder %s38, %s41
      %p47 = scmp.eq.s32.totalorder %s28, 0
      %p48 = por %p46, %p47
      %p49 = scmp.ne.s32.totalorder %s38, %s41
      %p50 = scmp.eq.s32.totalorder %s33, 2
      %p51 = por %p49, %p50
      %p52 = scmp.ne.s32.totalorder %s41, %s42
      %p53 = scmp.eq.s32.totalorder %s33, 0
      %p54 = por %p52, %p53
      %p55 = scmp.ne.s32.totalorder %s41, %s42
      %p56 = scmp.eq.s32.totalorder %s34, 2
      %p57 = por %p55, %p56
      %p59 = scmp.ne.s32.totalorder %s42, %s58
      %p60 = scmp.eq.s32.totalorder %s34, 0
      %p61 = por %p59, %p60
      %s62 = ssub.s32 %s28, %s35
      %p63 = scmp.eq.s32.totalorder %s62, 0
      %s65 = sadd.s32 %s64, 1
      %s66 = scalar_select %p63, %s64, %s65
      %p69 = pneg %p63
      %p70 = scmp.eq.s32.totalorder %s28, 2
      %p71 = por %p69, %p70
      %p72 = scmp.ne.s32.totalorder %s64, %s67
      %p73 = scmp.eq.s32.totalorder %s28, 0
      %p74 = por %p72, %p73
      %p75 = scmp.ne.s32.totalorder %s64, %s67
      %p76 = scmp.eq.s32.totalorder %s33, 2
      %p77 = por %p75, %p76
      %p78 = scmp.ne.s32.totalorder %s67, %s68
      %p79 = scmp.eq.s32.totalorder %s33, 0
      %p80 = por %p78, %p79
      %p81 = scmp.ne.s32.totalorder %s67, %s68
      %p82 = scmp.eq.s32.totalorder %s34, 2
      %p83 = por %p81, %p82
      %p85 = scmp.ne.s32.totalorder %s68, %s84
      %p86 = scmp.eq.s32.totalorder %s34, 0
      %p87 = por %p85, %p86
      %s88 = ssub.s32 %s28, %s35
      %p89 = scmp.eq.s32.totalorder %s88, 0
      %s91 = sadd.s32 %s90, 1
      %s92 = scalar_select %p89, %s90, %s91
      %p95 = pneg %p89
      %p96 = scmp.eq.s32.totalorder %s28, 2
      %p97 = por %p95, %p96
      %p98 = scmp.ne.s32.totalorder %s90, %s93
      %p99 = scmp.eq.s32.totalorder %s28, 0
      %p100 = por %p98, %p99
      %p101 = scmp.ne.s32.totalorder %s90, %s93
      %p102 = scmp.eq.s32.totalorder %s33, 2
      %p103 = por %p101, %p102
      %p104 = scmp.ne.s32.totalorder %s93, %s94
      %p105 = scmp.eq.s32.totalorder %s33, 0
      %p106 = por %p104, %p105
      %p107 = scmp.ne.s32.totalorder %s93, %s94
      %p108 = scmp.eq.s32.totalorder %s34, 2
      %p109 = por %p107, %p108
      %p111 = scmp.ne.s32.totalorder %s94, %s110
      %p112 = scmp.eq.s32.totalorder %s34, 0
      %p113 = por %p111, %p112
      %s114 = ssub.s32 %s28, %s35
      %p115 = scmp.eq.s32.totalorder %s114, 0
      %s117 = sadd.s32 %s116, 1
      %s118 = scalar_select %p115, %s116, %s117
      %p121 = pneg %p115
      %p122 = scmp.eq.s32.totalorder %s28, 2
      %p123 = por %p121, %p122
      %p124 = scmp.ne.s32.totalorder %s116, %s119
      %p125 = scmp.eq.s32.totalorder %s28, 0
      %p126 = por %p124, %p125
      %p127 = scmp.ne.s32.totalorder %s116, %s119
      %p128 = scmp.eq.s32.totalorder %s33, 2
      %p129 = por %p127, %p128
      %p130 = scmp.ne.s32.totalorder %s119, %s120
      %p131 = scmp.eq.s32.totalorder %s33, 0
      %p132 = por %p130, %p131
      %p133 = scmp.ne.s32.totalorder %s119, %s120
      %p134 = scmp.eq.s32.totalorder %s34, 2
      %p135 = por %p133, %p134
      %p137 = scmp.ne.s32.totalorder %s120, %s136
      %p138 = scmp.eq.s32.totalorder %s34, 0
      %p139 = por %p137, %p138
      %p140 = scmp.le.s32.totalorder 1, %s28
      %p141 = scmp.lt.s32.totalorder %s28, 4
      %p142 = pnand %p140, %p141
      %p143 = pneg %p142
      // Predicated region
      $region9: #{tpu_custom_call.1} parent=5 // pred_check
        _
      $region10: #{tpu_custom_call.1} parent=5 // pred_check_branch
        %145 = sbr.rel (%p142) target = $region12
      $region11: #{tpu_custom_call.1} parent=5 // pred_region
        %s146 = ssub.s32 %s28, 1
      $region12: #{tpu_custom_call.1} parent=5 // pred_fallthru
        _
      %p147 = scmp.lt.s32.totalorder %s28, 3
      // Predicated region
      $region13: #{tpu_custom_call.1} parent=5 // pred_check
        %p148 = pneg %p147
      $region14: #{tpu_custom_call.1} parent=5 // pred_check_branch
        %150 = sbr.rel (%p148) target = $region16
      $region15: #{tpu_custom_call.1} parent=5 // pred_region
        // Predicated region
        $region17: #{tpu_custom_call.1} parent=15 // pred_check
          %p151 = pneg %p48
        $region18: #{tpu_custom_call.1} parent=15 // pred_check_branch
          %153 = sbr.rel (%p151) target = $region20
        $region19: #{tpu_custom_call.1} parent=15 // pred_region
          %s154 = sand.u32 %s38, 1
          %s155 = scalar_lea.sflag [#allocation6], %s154
          %s156 = sand.u32 %s38, 1
          %s157 = smul.addr %s156, 32
          %s158 = scalar_lea.vmem [#allocation5], %s157
          %s160 = ssub.s32 512, 512
          %161 = vsyncadd %s155, %s160
          %s162 = smul.addr %s28, 128
          %s163 = scalar_lea.hbm %s2, %s162
          %s164 = sshll.u32 %s158, 4
          %s165 = int_to_ptr.vmem [resolvable:$true] %s164
          %170 = dma.hbm_to_vmem [thread:$0]  %s163, 512, %s165, %s155, 384, 128, 8
        $region20: #{tpu_custom_call.1} parent=15 // pred_fallthru
          _
        // Predicated region
        $region21: #{tpu_custom_call.1} parent=15 // pred_check
          %p171 = pneg %p74
        $region22: #{tpu_custom_call.1} parent=15 // pred_check_branch
          %173 = sbr.rel (%p171) target = $region24
        $region23: #{tpu_custom_call.1} parent=15 // pred_region
          %p174 = scmp.lt.s32.totalorder %s28, 2
          %s175 = scalar_select %p174, %s28, 2
          %s176 = scalar_lea.vmem %s3, %s175
        $region24: #{tpu_custom_call.1} parent=15 // pred_fallthru
          _
      $region16: #{tpu_custom_call.1} parent=5 // pred_fallthru
        _
      %p177 = scmp.le.s32.totalorder 1, %s28
      %p178 = scmp.lt.s32.totalorder %s28, 4
      %p179 = pnand %p177, %p178
      %p180 = pneg %p179
      // Predicated region
      $region25: #{tpu_custom_call.1} parent=5 // pred_check
        _
      $region26: #{tpu_custom_call.1} parent=5 // pred_check_branch
        %182 = sbr.rel (%p179) target = $region28
      $region27: #{tpu_custom_call.1} parent=5 // pred_region
        %s183 = ssub.s32 %s28, 1
        %s184 = sand.u32 %s41, 1
        %s185 = scalar_lea.sflag [#allocation6], %s184
        %s186 = sand.u32 %s41, 1
        %s187 = smul.addr %s186, 32
        %s188 = scalar_lea.vmem [#allocation5], %s187
        // Predicated region
        $region29: #{tpu_custom_call.1} parent=27 // pred_check
          %p189 = pneg %p54
        $region30: #{tpu_custom_call.1} parent=27 // pred_check_branch
          %191 = sbr.rel (%p189) target = $region32
        $region31: #{tpu_custom_call.1} parent=27 // pred_region
          %192 = dma.done %s185, 512
        $region32: #{tpu_custom_call.1} parent=27 // pred_fallthru
          _
        %s193 = sand.u32 %s41, 1
        %s194 = scalar_lea.sflag [#allocation6], %s193
        %s195 = sand.u32 %s41, 1
        %s196 = smul.addr %s195, 32
        %s197 = scalar_lea.vmem [#allocation5], %s196
        %p198 = pneg %p54
        %p199 = pneg %p51
        %p200 = scmp.lt.s32.totalorder %s33, 2
        %s201 = scalar_select %p200, %s33, 2
        %s202 = scalar_lea.vmem %s3, %s201
        %p203 = pneg %p80
        %p204 = pneg %p77
        %p205 = pneg %p106
        %p206 = pneg %p103
        %s207 = sand.u32 %s93, 1
        %s208 = scalar_lea.sflag [#allocation7], %s207
        %s209 = sand.u32 %s93, 1
        %s210 = smul.addr %s209, 8
        %s211 = scalar_lea.vmem [#allocation8], %s210
        %p212 = pneg %p132
        %p213 = pneg %p129
        %s214 = sand.u32 %s119, 1
        %s215 = scalar_lea.sflag [#allocation10], %s214
        %s216 = sand.u32 %s119, 1
        %s217 = smul.addr %s216, 8
        %s218 = scalar_lea.vmem [#allocation9], %s217
        %p219 = scmp.lt.s32.totalorder %s33, 2
        %s220 = scalar_select %p219, %s33, 2
        %s221 = scalar_lea.vmem %s3, %s220
        %v222 = vld [vmem:[%s188] sm:$0xff]
        %v223 = vld [vmem:[%s188 + $0x8] sm:$0xff]
        %v224 = vld [vmem:[%s188 + $0x10] sm:$0xff]
        %v225 = vld [vmem:[%s188 + $0x18] sm:$0xff]
        %v226 = vld [vmem:[%s221] sm:$0x1]
        %v227 = vmax.f32 %v222, %v223
        %v228 = vmax.f32 %v224, %v225
        %v229 = vmax.f32 %v227, %v228
        %v230 = vrot.slane %v229, 4
        %v231 = vmax.f32 %v229, %v230
        %v232 = vrot.slane %v231, 2
        %v233 = vmax.f32 %v231, %v232
        %v234 = vrot.slane %v233, 1
        %v235 = vmax.f32 %v233, %v234
        %v236 = vsub.f32 %v222, %v235
        %v237 = vsub.f32 %v223, %v235
        %v238 = vsub.f32 %v224, %v235
        %v239 = vsub.f32 %v225, %v235
        %v240 = vmul.f32 %v236, 1.442695
        %v241 = vpow.pop %v240
        %v242 = vmul.f32 %v237, 1.442695
        %v243 = vpow.pop %v242
        %v244 = vmul.f32 %v238, 1.442695
        %v245 = vpow.pop %v244
        %v246 = vmul.f32 %v239, 1.442695
        %v247 = vpow.pop %v246
        %v248 = vadd.f32 %v241, %v243
        %v249 = vadd.f32 %v248, %v245
        %v250 = vadd.f32 %v249, %v247
        %v251 = vrot.slane %v250, 4
        %v252 = vadd.f32 %v250, %v251
        %v253 = vrot.slane %v252, 2
        %v254 = vadd.f32 %v252, %v253
        %v255 = vrot.slane %v254, 1
        %v256 = vadd.f32 %v254, %v255
        %v257 = vlog2.pop %v256
        %v258 = vmul.f32 %v257, 0.6931472
        %v259 = vlaneseq
        %v260 = vshrl.u32 %v259, 7
        %v261 = vadd.s32 %v260, 8
        %v262 = vadd.s32 %v260, 16
        %v263 = vadd.s32 %v260, 24
        %v264 = vlaneseq
        %v265 = vshrl.u32 %v264, 7
        %v266 = vsub.s32 0, %v265
        %v267 = vrot.slane %v226, %v266
        %vm268 = vcmp.eq.s32.totalorder %v260, %v267
        %vm269 = vcmp.eq.s32.totalorder %v261, %v267
        %vm270 = vcmp.eq.s32.totalorder %v262, %v267
        %vm271 = vcmp.eq.s32.totalorder %v263, %v267
        %v272 = vsel %vm268, %v236, -1e+30
        %v273 = vsel %vm269, %v237, -1e+30
        %v274 = vsel %vm270, %v238, -1e+30
        %v275 = vsel %vm271, %v239, -1e+30
        %v276 = vmax.f32 %v272, %v273
        %v277 = vmax.f32 %v274, %v275
        %v278 = vmax.f32 %v276, %v277
        %v279 = vrot.slane %v278, 4
        %v280 = vmax.f32 %v278, %v279
        %v281 = vrot.slane %v280, 2
        %v282 = vmax.f32 %v280, %v281
        %v283 = vrot.slane %v282, 1
        %v284 = vmax.f32 %v282, %v283
        %vm285 = vcmp.lt.f32.partialorder %v236, %v284
        %vm286 = vcmp.lt.f32.partialorder %v237, %v284
        %vm287 = vcmp.lt.f32.partialorder %v238, %v284
        %vm288 = vcmp.lt.f32.partialorder %v239, %v284
        %v289 = vsel %vm285, %v236, -1e+30
        %v290 = vsel %vm286, %v237, -1e+30
        %v291 = vsel %vm287, %v238, -1e+30
        %v292 = vsel %vm288, %v239, -1e+30
        %v293 = vmax.f32 %v289, %v290
        %v294 = vmax.f32 %v291, %v292
        %v295 = vmax.f32 %v293, %v294
        %v296 = vrot.slane %v295, 4
        %v297 = vmax.f32 %v295, %v296
        %v298 = vrot.slane %v297, 2
        %v299 = vmax.f32 %v297, %v298
        %v300 = vrot.slane %v299, 1
        %v301 = vmax.f32 %v299, %v300
        %v302 = vsub.f32 %v284, %v258
        %v303 = vmul.f32 %v302, 1.442695
        %v304 = vpow.pop %v303
        %v305 = vsub.f32 %v301, %v258
        %v306 = vmul.f32 %v305, 1.442695
        %v307 = vpow.pop %v306
        %s308 = sld [smem:[#allocation3]]
        %s309 = sld [smem:[#allocation3 + $0x1]]
        %s310 = sld [smem:[#allocation3 + $0x2]]
        %s311 = sld [smem:[#allocation3 + $0x3]]
        %s312 = sld [smem:[#allocation3 + $0x4]]
        %s313 = sld [smem:[#allocation3 + $0x5]]
        %v314 = vstv %s309
        %v315 = vmul.f32 %v314, %v304
        %v316 = vstv %s308
        %v317 = vadd.f32 %v316, %v315
        %v318 = vstv %s310
        %v319 = vmul.f32 %v318, %v307
        %v320 = vadd.f32 %v317, %v319
        %v321 = vmul.f32 %v304, %v307
        %v322 = vstv %s311
        %v323 = vmul.f32 %v322, %v321
        %v324 = vadd.f32 %v320, %v323
        %v325 = vmul.f32 %v304, %v304
        %v326 = vstv %s312
        %v327 = vmul.f32 %v326, %v325
        %v328 = vadd.f32 %v324, %v327
        %v329 = vand.u32 2147483647, %v304
        %v330 = vstv %s313
        %v331 = vmul.f32 %v330, %v329
        %v332 = vadd.f32 %v328, %v331
        %s333 = sld [smem:[#allocation3 + $0x6]]
        %s334 = sld [smem:[#allocation3 + $0x7]]
        %s335 = sld [smem:[#allocation3 + $0x8]]
        %s336 = sld [smem:[#allocation3 + $0x9]]
        %s337 = sld [smem:[#allocation3 + $0xa]]
        %s338 = sld [smem:[#allocation3 + $0xb]]
        %v339 = vstv %s334
        %v340 = vmul.f32 %v339, %v307
        %v341 = vstv %s333
        %v342 = vadd.f32 %v341, %v340
        %v343 = vstv %s335
        %v344 = vmul.f32 %v343, %v332
        %v345 = vadd.f32 %v342, %v344
        %v346 = vmul.f32 %v307, %v332
        %v347 = vstv %s336
        %v348 = vmul.f32 %v347, %v346
        %v349 = vadd.f32 %v345, %v348
        %v350 = vmul.f32 %v307, %v307
        %v351 = vstv %s337
        %v352 = vmul.f32 %v351, %v350
        %v353 = vadd.f32 %v349, %v352
        %v354 = vand.u32 2147483647, %v307
        %v355 = vstv %s338
        %v356 = vmul.f32 %v355, %v354
        %v357 = vadd.f32 %v353, %v356
        %s358 = sld [smem:[#allocation3 + $0xc]]
        %s359 = sld [smem:[#allocation3 + $0xd]]
        %s360 = sld [smem:[#allocation3 + $0xe]]
        %s361 = sld [smem:[#allocation3 + $0xf]]
        %s362 = sld [smem:[#allocation3 + $0x10]]
        %s363 = sld [smem:[#allocation3 + $0x11]]
        %v364 = vstv %s359
        %v365 = vmul.f32 %v364, %v332
        %v366 = vstv %s358
        %v367 = vadd.f32 %v366, %v365
        %v368 = vstv %s360
        %v369 = vmul.f32 %v368, %v357
        %v370 = vadd.f32 %v367, %v369
        %v371 = vmul.f32 %v332, %v357
        %v372 = vstv %s361
        %v373 = vmul.f32 %v372, %v371
        %v374 = vadd.f32 %v370, %v373
        %v375 = vmul.f32 %v332, %v332
        %v376 = vstv %s362
        %v377 = vmul.f32 %v376, %v375
        %v378 = vadd.f32 %v374, %v377
        %v379 = vand.u32 2147483647, %v332
        %v380 = vstv %s363
        %v381 = vmul.f32 %v380, %v379
        %v382 = vadd.f32 %v378, %v381
        %s383 = sld [smem:[#allocation3 + $0x12]]
        %s384 = sld [smem:[#allocation3 + $0x13]]
        %s385 = sld [smem:[#allocation3 + $0x14]]
        %s386 = sld [smem:[#allocation3 + $0x15]]
        %s387 = sld [smem:[#allocation3 + $0x16]]
        %s388 = sld [smem:[#allocation3 + $0x17]]
        %v389 = vstv %s384
        %v390 = vmul.f32 %v389, %v357
        %v391 = vstv %s383
        %v392 = vadd.f32 %v391, %v390
        %v393 = vstv %s385
        %v394 = vmul.f32 %v393, %v382
        %v395 = vadd.f32 %v392, %v394
        %v396 = vmul.f32 %v357, %v382
        %v397 = vstv %s386
        %v398 = vmul.f32 %v397, %v396
        %v399 = vadd.f32 %v395, %v398
        %v400 = vmul.f32 %v357, %v357
        %v401 = vstv %s387
        %v402 = vmul.f32 %v401, %v400
        %v403 = vadd.f32 %v399, %v402
        %v404 = vand.u32 2147483647, %v357
        %v405 = vstv %s388
        %v406 = vmul.f32 %v405, %v404
        %v407 = vadd.f32 %v403, %v406
        %s408 = sld [smem:[#allocation3 + $0x18]]
        %s409 = sld [smem:[#allocation3 + $0x19]]
        %s410 = sld [smem:[#allocation3 + $0x1a]]
        %s411 = sld [smem:[#allocation3 + $0x1b]]
        %s412 = sld [smem:[#allocation3 + $0x1c]]
        %s413 = sld [smem:[#allocation3 + $0x1d]]
        %v414 = vstv %s409
        %v415 = vmul.f32 %v414, %v382
        %v416 = vstv %s408
        %v417 = vadd.f32 %v416, %v415
        %v418 = vstv %s410
        %v419 = vmul.f32 %v418, %v407
        %v420 = vadd.f32 %v417, %v419
        %v421 = vmul.f32 %v382, %v407
        %v422 = vstv %s411
        %v423 = vmul.f32 %v422, %v421
        %v424 = vadd.f32 %v420, %v423
        %v425 = vmul.f32 %v382, %v382
        %v426 = vstv %s412
        %v427 = vmul.f32 %v426, %v425
        %v428 = vadd.f32 %v424, %v427
        %v429 = vand.u32 2147483647, %v382
        %v430 = vstv %s413
        %v431 = vmul.f32 %v430, %v429
        %v432 = vadd.f32 %v428, %v431
        %s433 = sld [smem:[#allocation3 + $0x1e]]
        %s434 = sld [smem:[#allocation3 + $0x1f]]
        %s435 = sld [smem:[#allocation3 + $0x20]]
        %s436 = sld [smem:[#allocation3 + $0x21]]
        %s437 = sld [smem:[#allocation3 + $0x22]]
        %s438 = sld [smem:[#allocation3 + $0x23]]
        %v439 = vstv %s434
        %v440 = vmul.f32 %v439, %v407
        %v441 = vstv %s433
        %v442 = vadd.f32 %v441, %v440
        %v443 = vstv %s435
        %v444 = vmul.f32 %v443, %v432
        %v445 = vadd.f32 %v442, %v444
        %v446 = vmul.f32 %v407, %v432
        %v447 = vstv %s436
        %v448 = vmul.f32 %v447, %v446
        %v449 = vadd.f32 %v445, %v448
        %v450 = vmul.f32 %v407, %v407
        %v451 = vstv %s437
        %v452 = vmul.f32 %v451, %v450
        %v453 = vadd.f32 %v449, %v452
        %v454 = vand.u32 2147483647, %v407
        %v455 = vstv %s438
        %v456 = vmul.f32 %v455, %v454
        %v457 = vadd.f32 %v453, %v456
        %s458 = sld [smem:[#allocation3 + $0x24]]
        %s459 = sld [smem:[#allocation3 + $0x25]]
        %s460 = sld [smem:[#allocation3 + $0x26]]
        %s461 = sld [smem:[#allocation3 + $0x27]]
        %s462 = sld [smem:[#allocation3 + $0x28]]
        %s463 = sld [smem:[#allocation3 + $0x29]]
        %v464 = vstv %s459
        %v465 = vmul.f32 %v464, %v432
        %v466 = vstv %s458
        %v467 = vadd.f32 %v466, %v465
        %v468 = vstv %s460
        %v469 = vmul.f32 %v468, %v457
        %v470 = vadd.f32 %v467, %v469
        %v471 = vmul.f32 %v432, %v457
        %v472 = vstv %s461
        %v473 = vmul.f32 %v472, %v471
        %v474 = vadd.f32 %v470, %v473
        %v475 = vmul.f32 %v432, %v432
        %v476 = vstv %s462
        %v477 = vmul.f32 %v476, %v475
        %v478 = vadd.f32 %v474, %v477
        %v479 = vand.u32 2147483647, %v432
        %v480 = vstv %s463
        %v481 = vmul.f32 %v480, %v479
        %v482 = vadd.f32 %v478, %v481
        %s483 = sld [smem:[#allocation3 + $0x2a]]
        %s484 = sld [smem:[#allocation3 + $0x2b]]
        %s485 = sld [smem:[#allocation3 + $0x2c]]
        %s486 = sld [smem:[#allocation3 + $0x2d]]
        %s487 = sld [smem:[#allocation3 + $0x2e]]
        %s488 = sld [smem:[#allocation3 + $0x2f]]
        %v489 = vstv %s484
        %v490 = vmul.f32 %v489, %v457
        %v491 = vstv %s483
        %v492 = vadd.f32 %v491, %v490
        %v493 = vstv %s485
        %v494 = vmul.f32 %v493, %v482
        %v495 = vadd.f32 %v492, %v494
        %v496 = vmul.f32 %v457, %v482
        %v497 = vstv %s486
        %v498 = vmul.f32 %v497, %v496
        %v499 = vadd.f32 %v495, %v498
        %v500 = vmul.f32 %v457, %v457
        %v501 = vstv %s487
        %v502 = vmul.f32 %v501, %v500
        %v503 = vadd.f32 %v499, %v502
        %v504 = vand.u32 2147483647, %v457
        %v505 = vstv %s488
        %v506 = vmul.f32 %v505, %v504
        %v507 = vadd.f32 %v503, %v506
        %s508 = sld [smem:[#allocation3 + $0x30]]
        %s509 = sld [smem:[#allocation3 + $0x31]]
        %s510 = sld [smem:[#allocation3 + $0x32]]
        %s511 = sld [smem:[#allocation3 + $0x33]]
        %s512 = sld [smem:[#allocation3 + $0x34]]
        %s513 = sld [smem:[#allocation3 + $0x35]]
        %v514 = vstv %s509
        %v515 = vmul.f32 %v514, %v482
        %v516 = vstv %s508
        %v517 = vadd.f32 %v516, %v515
        %v518 = vstv %s510
        %v519 = vmul.f32 %v518, %v507
        %v520 = vadd.f32 %v517, %v519
        %v521 = vmul.f32 %v482, %v507
        %v522 = vstv %s511
        %v523 = vmul.f32 %v522, %v521
        %v524 = vadd.f32 %v520, %v523
        %v525 = vmul.f32 %v482, %v482
        %v526 = vstv %s512
        %v527 = vmul.f32 %v526, %v525
        %v528 = vadd.f32 %v524, %v527
        %v529 = vand.u32 2147483647, %v482
        %v530 = vstv %s513
        %v531 = vmul.f32 %v530, %v529
        %v532 = vadd.f32 %v528, %v531
        %s533 = sld [smem:[#allocation3 + $0x36]]
        %s534 = sld [smem:[#allocation3 + $0x37]]
        %s535 = sld [smem:[#allocation3 + $0x38]]
        %s536 = sld [smem:[#allocation3 + $0x39]]
        %s537 = sld [smem:[#allocation3 + $0x3a]]
        %s538 = sld [smem:[#allocation3 + $0x3b]]
        %v539 = vstv %s534
        %v540 = vmul.f32 %v539, %v507
        %v541 = vstv %s533
        %v542 = vadd.f32 %v541, %v540
        %v543 = vstv %s535
        %v544 = vmul.f32 %v543, %v532
        %v545 = vadd.f32 %v542, %v544
        %v546 = vmul.f32 %v507, %v532
        %v547 = vstv %s536
        %v548 = vmul.f32 %v547, %v546
        %v549 = vadd.f32 %v545, %v548
        %v550 = vmul.f32 %v507, %v507
        %v551 = vstv %s537
        %v552 = vmul.f32 %v551, %v550
        %v553 = vadd.f32 %v549, %v552
        %v554 = vand.u32 2147483647, %v507
        %v555 = vstv %s538
        %v556 = vmul.f32 %v555, %v554
        %v557 = vadd.f32 %v553, %v556
        %s558 = sld [smem:[#allocation3 + $0x3c]]
        %s559 = sld [smem:[#allocation3 + $0x3d]]
        %s560 = sld [smem:[#allocation3 + $0x3e]]
        %s561 = sld [smem:[#allocation3 + $0x3f]]
        %s562 = sld [smem:[#allocation3 + $0x40]]
        %s563 = sld [smem:[#allocation3 + $0x41]]
        %v564 = vstv %s559
        %v565 = vmul.f32 %v564, %v532
        %v566 = vstv %s558
        %v567 = vadd.f32 %v566, %v565
        %v568 = vstv %s560
        %v569 = vmul.f32 %v568, %v557
        %v570 = vadd.f32 %v567, %v569
        %v571 = vmul.f32 %v532, %v557
        %v572 = vstv %s561
        %v573 = vmul.f32 %v572, %v571
        %v574 = vadd.f32 %v570, %v573
        %v575 = vmul.f32 %v532, %v532
        %v576 = vstv %s562
        %v577 = vmul.f32 %v576, %v575
        %v578 = vadd.f32 %v574, %v577
        %v579 = vand.u32 2147483647, %v532
        %v580 = vstv %s563
        %v581 = vmul.f32 %v580, %v579
        %v582 = vadd.f32 %v578, %v581
        %s583 = sld [smem:[#allocation3 + $0x42]]
        %s584 = sld [smem:[#allocation3 + $0x43]]
        %s585 = sld [smem:[#allocation3 + $0x44]]
        %s586 = sld [smem:[#allocation3 + $0x45]]
        %s587 = sld [smem:[#allocation3 + $0x46]]
        %s588 = sld [smem:[#allocation3 + $0x47]]
        %v589 = vstv %s584
        %v590 = vmul.f32 %v589, %v557
        %v591 = vstv %s583
        %v592 = vadd.f32 %v591, %v590
        %v593 = vstv %s585
        %v594 = vmul.f32 %v593, %v582
        %v595 = vadd.f32 %v592, %v594
        %v596 = vmul.f32 %v557, %v582
        %v597 = vstv %s586
        %v598 = vmul.f32 %v597, %v596
        %v599 = vadd.f32 %v595, %v598
        %v600 = vmul.f32 %v557, %v557
        %v601 = vstv %s587
        %v602 = vmul.f32 %v601, %v600
        %v603 = vadd.f32 %v599, %v602
        %v604 = vand.u32 2147483647, %v557
        %v605 = vstv %s588
        %v606 = vmul.f32 %v605, %v604
        %v607 = vadd.f32 %v603, %v606
        %s608 = sld [smem:[#allocation3 + $0x48]]
        %s609 = sld [smem:[#allocation3 + $0x49]]
        %s610 = sld [smem:[#allocation3 + $0x4a]]
        %s611 = sld [smem:[#allocation3 + $0x4b]]
        %s612 = sld [smem:[#allocation3 + $0x4c]]
        %s613 = sld [smem:[#allocation3 + $0x4d]]
        %v614 = vstv %s609
        %v615 = vmul.f32 %v614, %v582
        %v616 = vstv %s608
        %v617 = vadd.f32 %v616, %v615
        %v618 = vstv %s610
        %v619 = vmul.f32 %v618, %v607
        %v620 = vadd.f32 %v617, %v619
        %v621 = vmul.f32 %v582, %v607
        %v622 = vstv %s611
        %v623 = vmul.f32 %v622, %v621
        %v624 = vadd.f32 %v620, %v623
        %v625 = vmul.f32 %v582, %v582
        %v626 = vstv %s612
        %v627 = vmul.f32 %v626, %v625
        %v628 = vadd.f32 %v624, %v627
        %v629 = vand.u32 2147483647, %v582
        %v630 = vstv %s613
        %v631 = vmul.f32 %v630, %v629
        %v632 = vadd.f32 %v628, %v631
        %s633 = sld [smem:[#allocation3 + $0x4e]]
        %s634 = sld [smem:[#allocation3 + $0x4f]]
        %s635 = sld [smem:[#allocation3 + $0x50]]
        %s636 = sld [smem:[#allocation3 + $0x51]]
        %s637 = sld [smem:[#allocation3 + $0x52]]
        %s638 = sld [smem:[#allocation3 + $0x53]]
        %v639 = vstv %s634
        %v640 = vmul.f32 %v639, %v607
        %v641 = vstv %s633
        %v642 = vadd.f32 %v641, %v640
        %v643 = vstv %s635
        %v644 = vmul.f32 %v643, %v632
        %v645 = vadd.f32 %v642, %v644
        %v646 = vmul.f32 %v607, %v632
        %v647 = vstv %s636
        %v648 = vmul.f32 %v647, %v646
        %v649 = vadd.f32 %v645, %v648
        %v650 = vmul.f32 %v607, %v607
        %v651 = vstv %s637
        %v652 = vmul.f32 %v651, %v650
        %v653 = vadd.f32 %v649, %v652
        %v654 = vand.u32 2147483647, %v607
        %v655 = vstv %s638
        %v656 = vmul.f32 %v655, %v654
        %v657 = vadd.f32 %v653, %v656
        %v658 = vsub.f32 0.0, %v302
        %v659 = vlaneseq
        %v660 = vand.u32 %v659, 127
        %s661 = smul.u32 %s33, 128
        %v662 = vstv %s661
        %v663 = vadd.s32 %v662, %v660
        %s664 = sld [smem:[#allocation4]]
        %v665 = vstv %s664
        %vm666 = vcmp.lt.s32.totalorder %v663, %v665
        %v667 = vsel %vm666, %v657, 0.0
        %vm668 = vcmask 1040384
        %v669 = vsel %vm668, %v667, 0.0
        %670 = vadd.xlane.f32.xlu0 %v669
        %v671 = vpop.xlane.xlu0 %670
        %v672 = vrot.slane %v671, 4
        %v673 = vadd.f32 %v671, %v672
        %v674 = vrot.slane %v673, 2
        %v675 = vadd.f32 %v673, %v674
        %v676 = vrot.slane %v675, 1
        %v677 = vadd.f32 %v675, %v676
        %s678 = vtos %v677
        %v679 = vsel %vm666, %v658, 0.0
        %v680 = vsel %vm668, %v679, 0.0
        %681 = vadd.xlane.f32.xlu0 %v680
        %v682 = vpop.xlane.xlu0 %681
        %v683 = vrot.slane %v682, 4
        %v684 = vadd.f32 %v682, %v683
        %v685 = vrot.slane %v684, 2
        %v686 = vadd.f32 %v684, %v685
        %v687 = vrot.slane %v686, 1
        %v688 = vadd.f32 %v686, %v687
        %s689 = vtos %v688
        %v690 = vstv %s678
        %691 = vst [vmem:[%s211] sm:$0xff] %v690
        %v692 = vstv %s689
        %693 = vst [vmem:[%s218] sm:$0xff] %v692
        %s694 = sand.u32 %s93, 1
        %s695 = scalar_lea.sflag [#allocation7], %s694
        %s696 = sand.u32 %s93, 1
        %s697 = smul.addr %s696, 8
        %s698 = scalar_lea.vmem [#allocation8], %s697
        %s699 = sand.u32 %s119, 1
        %s700 = scalar_lea.sflag [#allocation10], %s699
        %s701 = sand.u32 %s119, 1
        %s702 = smul.addr %s701, 8
        %s703 = scalar_lea.vmem [#allocation9], %s702
        // Predicated region
        $region33: #{tpu_custom_call.1} parent=27 // pred_check
          %p704 = pneg %p103
        $region34: #{tpu_custom_call.1} parent=27 // pred_check_branch
          %706 = sbr.rel (%p704) target = $region36
        $region35: #{tpu_custom_call.1} parent=27 // pred_region
          %s708 = ssub.s32 128, 128
          %709 = vsyncadd %s695, %s708
          %s710 = smul.addr %s33, 128
          %s711 = scalar_lea.hbm %s4, %s710
          %s713 = sshll.u32 %s698, 4
          %s714 = int_to_ptr.vmem [resolvable:$true] %s713
          %716 = dma.vmem_to_hbm [thread:$0]  %s714, 128, %s711, %s695
        $region36: #{tpu_custom_call.1} parent=27 // pred_fallthru
          _
        // Predicated region
        $region37: #{tpu_custom_call.1} parent=27 // pred_check
          %p717 = pneg %p129
        $region38: #{tpu_custom_call.1} parent=27 // pred_check_branch
          %719 = sbr.rel (%p717) target = $region40
        $region39: #{tpu_custom_call.1} parent=27 // pred_region
          %s721 = ssub.s32 128, 128
          %722 = vsyncadd %s700, %s721
          %s723 = smul.addr %s33, 128
          %s724 = scalar_lea.hbm %s5, %s723
          %s726 = sshll.u32 %s703, 4
          %s727 = int_to_ptr.vmem [resolvable:$true] %s726
          %729 = dma.vmem_to_hbm [thread:$0]  %s727, 128, %s724, %s700
        $region40: #{tpu_custom_call.1} parent=27 // pred_fallthru
          _
      $region28: #{tpu_custom_call.1} parent=5 // pred_fallthru
        _
      %p730 = scmp.le.s32.totalorder 2, %s28
      // Predicated region
      $region41: #{tpu_custom_call.1} parent=5 // pred_check
        %p731 = pneg %p730
      $region42: #{tpu_custom_call.1} parent=5 // pred_check_branch
        %733 = sbr.rel (%p731) target = $region44
      $region43: #{tpu_custom_call.1} parent=5 // pred_region
        %s734 = ssub.s32 %s28, 2
        // Predicated region
        $region45: #{tpu_custom_call.1} parent=43 // pred_check
          %p735 = pneg %p109
        $region46: #{tpu_custom_call.1} parent=43 // pred_check_branch
          %737 = sbr.rel (%p735) target = $region48
        $region47: #{tpu_custom_call.1} parent=43 // pred_region
          %s738 = sand.u32 %s94, 1
          %s739 = scalar_lea.sflag [#allocation7], %s738
          %s740 = sand.u32 %s94, 1
          %s741 = smul.addr %s740, 8
          %s742 = scalar_lea.vmem [#allocation8], %s741
          %743 = dma.done %s739, 128
        $region48: #{tpu_custom_call.1} parent=43 // pred_fallthru
          _
        // Predicated region
        $region49: #{tpu_custom_call.1} parent=43 // pred_check
          %p744 = pneg %p135
        $region50: #{tpu_custom_call.1} parent=43 // pred_check_branch
          %746 = sbr.rel (%p744) target = $region52
        $region51: #{tpu_custom_call.1} parent=43 // pred_region
          %s747 = sand.u32 %s120, 1
          %s748 = scalar_lea.sflag [#allocation10], %s747
          %s749 = sand.u32 %s120, 1
          %s750 = smul.addr %s749, 8
          %s751 = scalar_lea.vmem [#allocation9], %s750
          %752 = dma.done %s748, 128
        $region52: #{tpu_custom_call.1} parent=43 // pred_fallthru
          _
      $region44: #{tpu_custom_call.1} parent=5 // pred_fallthru
        _
    $region6: #{tpu_custom_call.1} parent=1 // loop_footer
      %s32 = sadd.s32 1, %s28
    $region7: #{tpu_custom_call.1} parent=1 // loop_footer_branch
      %27 = sbr.rel target = $region3
    $region8: #{tpu_custom_call.1} parent=1 // loop_exit
      _
    %753 = vsyncpa [#allocation6], 1
    %s754 = scalar_lea.sflag [#allocation6], 1
    %755 = vsyncpa %s754, 1
    %756 = vsyncpa [#allocation7], 1
    %s757 = scalar_lea.sflag [#allocation7], 1
    %758 = vsyncpa %s757, 1
    %759 = vsyncpa [#allocation10], 1
    %s760 = scalar_lea.sflag [#allocation10], 1
    %761 = vsyncpa %s760, 1

</llo_original>
